<compile_context>
chip_gen: v6e
topology: v6e:2x2x1
jax: 0.10.0
libtpu: 0.0.40
codegen_flags: <defaults>
</compile_context>

<pallas_src>
import functools

import jax
import jax.numpy as jnp
from jax.experimental import pallas as pl
from jax.experimental.pallas import tpu as pltpu


@functools.lru_cache(maxsize=None)
def _roll_like_np():
    """Probe pltpu.roll's sign convention once (expected: same as np.roll)."""
    def kern(x_ref, o_ref):
        o_ref[...] = pltpu.roll(x_ref[...], shift=1, axis=1)

    x = jax.lax.broadcasted_iota(jnp.float32, (8, 128), 1)
    y = pl.pallas_call(kern, out_shape=jax.ShapeDtypeStruct((8, 128), jnp.float32))(x)
    # np.roll convention: element 0 moves to index 1.
    return bool(y[0, 1] == 0.0)


def _make_residual_block_kernel(C, H, W, L, nb, norm_mode, use_last_relu,
                                mm_dtype, roll_like_np):
    HW = H * W
    # tap order must match the host-side weight-slab column order
    shifts = [dh * W + dw for dh in (-1, 0, 1) for dw in (-1, 0, 1)]
    # we want tap_k[l] = x[l + s]; with np.roll convention that is shift = -s
    shift_amt = [((-s) % L) if roll_like_np else (s % L) for s in shifts]

    def kernel(x_ref, w1_ref, b1_ref, w2_ref, b2_ref, mask_ref, seg_ref,
               segt_ref, o_ref, colbuf):
        x = x_ref[...].astype(jnp.float32)                     # (C, L)

        def conv3x3(inp, w_ref, b_ref):
            # im2col via XLU rolls + precomputed boundary masks; one MXU matmul.
            for k, s in enumerate(shifts):
                if s == 0:
                    t = inp                                    # centre tap: no mask needed
                else:
                    t = pltpu.roll(inp, shift=shift_amt[k], axis=1)
                    t = t * mask_ref[k:k + 1, :]               # kill halo / wrap lanes
                colbuf[k * C:(k + 1) * C, :] = t.astype(colbuf.dtype)
            y = jnp.dot(w_ref[...], colbuf[...],
                        preferred_element_type=jnp.float32)    # (C, 9C) @ (9C, L)
            return y + b_ref[...]                              # (C, 1) VPU broadcast add

        def norm(z):
            if norm_mode != 'instance':
                # TODO(synk): normalization_mode='batch' needs cross-batch running
                # statistics; only 'none' and 'instance' run in-kernel.
                return z
            inv = 1.0 / HW
            if nb == 1:
                m1 = jnp.sum(z, axis=1, keepdims=True) * inv
                m2 = jnp.sum(z * z, axis=1, keepdims=True) * inv
                var = jnp.maximum(m2 - m1 * m1, 0.0)
                return (z - m1) * jax.lax.rsqrt(var + 1e-5)
            # segmented per-sample statistics on the (otherwise idle) MXU
            segt = segt_ref[...]                                # (L, nbp), 0/1
            seg = seg_ref[...]                                  # (nbp, L), 0/1
            s1 = jnp.dot(z, segt, preferred_element_type=jnp.float32)      # (C, nbp)
            s2 = jnp.dot(z * z, segt, preferred_element_type=jnp.float32)  # (C, nbp)
            m1 = s1 * inv
            var = jnp.maximum(s2 * inv - m1 * m1, 0.0)
            scale = jax.lax.rsqrt(var + 1e-5)
            m1_full = jnp.dot(m1, seg, preferred_element_type=jnp.float32)
            sc_full = jnp.dot(scale, seg, preferred_element_type=jnp.float32)
            return (z - m1_full) * sc_full

        cur = jnp.maximum(norm(conv3x3(x, w1_ref, b1_ref)), 0.0)
        cur = norm(conv3x3(cur, w2_ref, b2_ref))
        cur = cur + x
        if use_last_relu:
            cur = jnp.maximum(cur, 0.0)
        o_ref[...] = cur.astype(o_ref.dtype)

    return kernel


def residual_block_2d(x_nchw, w1, b1, w2, b2, *, norm_mode='none',
                      use_last_relu=False, matmul_dtype=jnp.float32):
    """ResidualBlock2d forward (kernel_size=3, padding=1).

    x_nchw: (N, C, H, W); w*: (Cout=C, Cin=C, 3, 3) PyTorch layout; b*: (C,).
    matmul_dtype: opt-in jnp.bfloat16 for full-rate MXU + half-size colbuf when
    the accuracy budget allows (accumulation stays f32); default f32 keeps
    ~1e-6 agreement with the reference.
    # TODO(synk): one_pixel=True (1x1 conv) path is not implemented in-kernel.
    """
    N, C, H, W = x_nchw.shape
    HW = H * W
    mm_bytes = jnp.dtype(matmul_dtype).itemsize
    x_bytes = x_nchw.dtype.itemsize

    # ---- per-chip VMEM budget --------------------------------------------------
    try:
        vmem_cap = int(pltpu.get_tpu_info().vmem_capacity_bytes)
    except Exception:
        vmem_cap = 64 << 20                       # conservative (v7x physical)
    vmem_limit = min(int(0.75 * vmem_cap), 112 << 20)

    def step_bytes(d):
        Ld = d * HW
        io = 4 * C * Ld * x_bytes                 # double-buffered in + out blocks
        col = 9 * C * Ld * mm_bytes               # im2col scratch (single buffer)
        aux = 2 * (9 * Ld * 4 + 2 * max(8, d) * Ld * 4)   # masks + seg/segT
        wts = 4 * (9 * C * C * mm_bytes + C * 4)
        return io + col + aux + wts

    # ---- samples per grid step ---------------------------------------------------
    # lane-dense blocks: keep each block's lane count a multiple of 128
    divs = [d for d in range(1, N + 1) if N % d == 0 and (d * HW) % 128 == 0]
    if not divs:
        # TODO(synk): lane-ragged blocks (no divisor of N gives a 128-multiple of
        # H*W) need a padded-lane layout; not implemented.
        raise NotImplementedError("need a divisor d of N with (d*H*W) % 128 == 0")
    fit = [d for d in divs if step_bytes(d) <= vmem_limit // 2]   # headroom for vregs/spill
    cands = fit if fit else [min(divs)]
    # keep >= 2 grid steps when the chip exposes >1 TensorCore (v7x / megacore)
    n_cores = 1
    for attr in ("num_cores", "core_count"):
        v = getattr(jax.devices()[0], attr, None)
        if isinstance(v, int):
            n_cores = max(n_cores, v)
    if n_cores > 1:
        multi = [d for d in cands if N // d >= 2]
        if multi:
            cands = multi
    nb = max(cands)
    L = nb * HW
    nbp = ((nb + 7) // 8) * 8                      # pad segment dim to 8 for clean MXU tiles

    # ---- host-side layout plumbing (outside the kernel) --------------------------
    # channels -> sublanes, (sample, flattened spatial) -> lanes
    x_slab = jnp.transpose(x_nchw, (1, 0, 2, 3)).reshape(C, N * HW)

    # im2col weight slab (Cout, 9*Cin): column (kh*3+kw)*Cin + cin matches the
    # tap stacking order in the kernel; pre-cast to the matmul dtype.
    def weight_slab(w):
        return jnp.transpose(w, (0, 2, 3, 1)).reshape(C, 9 * C).astype(matmul_dtype)

    w1s, w2s = weight_slab(w1), weight_slab(w2)
    b1c = b1.reshape(C, 1).astype(jnp.float32)
    b2c = b2.reshape(C, 1).astype(jnp.float32)

    # 0/1 boundary masks per tap (halo / row-wrap / sample-wrap lanes -> 0),
    # built once host-side at block width (identical for every grid step).
    lane = jnp.arange(L, dtype=jnp.int32)
    wcol, prow = lane % W, lane % HW
    m_l, m_r = wcol >= 1, wcol < W - 1
    m_u, m_d = prow >= W, prow < HW - W
    rows = []
    for dh in (-1, 0, 1):
        for dw in (-1, 0, 1):
            m = jnp.ones((L,), bool)
            if dh == -1:
                m = m & m_u
            elif dh == 1:
                m = m & m_d
            if dw == -1:
                m = m & m_l
            elif dw == 1:
                m = m & m_r
            rows.append(m)
    mask = jnp.stack(rows).astype(jnp.float32)                     # (9, L)

    # per-sample segment matrices for batched instance norm (padded rows are zero)
    sample = lane // HW
    seg = (sample[None, :] == jnp.arange(nbp, dtype=jnp.int32)[:, None]
           ).astype(jnp.float32)                                   # (nbp, L)
    segt = seg.T                                                   # (L, nbp)

    kernel = _make_residual_block_kernel(C, H, W, L, nb, norm_mode, use_last_relu,
                                         matmul_dtype, _roll_like_np())

    const = lambda i: (0, 0)
    out_slab = pl.pallas_call(
        kernel,
        out_shape=jax.ShapeDtypeStruct((C, N * HW), x_nchw.dtype),
        grid_spec=pltpu.PrefetchScalarGridSpec(
            num_scalar_prefetch=0,
            grid=(N // nb,),
            in_specs=[
                pl.BlockSpec((C, L), lambda i: (0, i)),    # x slab
                pl.BlockSpec((C, 9 * C), const),           # conv1 weight slab
                pl.BlockSpec((C, 1), const),               # conv1 bias
                pl.BlockSpec((C, 9 * C), const),           # conv2 weight slab
                pl.BlockSpec((C, 1), const),               # conv2 bias
                pl.BlockSpec((9, L), const),               # boundary masks
                pl.BlockSpec((nbp, L), const),             # segment matrix
                pl.BlockSpec((L, nbp), const),             # segment matrix (transposed)
            ],
            out_specs=pl.BlockSpec((C, L), lambda i: (0, i)),
            scratch_shapes=[
                pltpu.VMEM((9 * C, L), matmul_dtype),      # im2col buffer
            ],
        ),
        compiler_params=pltpu.CompilerParams(
            dimension_semantics=("parallel",),
            vmem_limit_bytes=vmem_limit,
        ),
    )(x_slab, w1s, b1c, w2s, b2c, mask, seg, segt)

    return jnp.transpose(out_slab.reshape(C, N, H, W), (1, 0, 2, 3))


def _reference(x, w1, b1, w2, b2, norm_mode='none', use_last_relu=False):
    def conv(z, w, b):
        y = jax.lax.conv_general_dilated(
            z, w, window_strides=(1, 1), padding=((1, 1), (1, 1)),
            dimension_numbers=('NCHW', 'OIHW', 'NCHW'))
        return y + b[None, :, None, None]

    def norm(z):
        if norm_mode == 'instance':
            m = jnp.mean(z, axis=(2, 3), keepdims=True)
            v = jnp.mean((z - m) ** 2, axis=(2, 3), keepdims=True)
            return (z - m) * jax.lax.rsqrt(v + 1e-5)
        return z

    cur = jax.nn.relu(norm(conv(x, w1, b1)))
    cur = norm(conv(cur, w2, b2)) + x
    if use_last_relu:
        cur = jax.nn.relu(cur)
    return cur


if __name__ == "__main__":
    N, C, H, W = 2, 4, 16, 16
    key = jax.random.PRNGKey(0)
    kx, kw1, kb1, kw2, kb2 = jax.random.split(key, 5)

    x = jax.random.normal(kx, (N, C, H, W), dtype=jnp.float32)

    # deterministic 'he' init: std = sqrt(2 / fan_in), fan_in = C * 3 * 3
    fan_in = C * 3 * 3
    he_std = (2.0 / fan_in) ** 0.5
    w1 = he_std * jax.random.normal(kw1, (C, C, 3, 3), dtype=jnp.float32)
    w2 = he_std * jax.random.normal(kw2, (C, C, 3, 3), dtype=jnp.float32)
    bound = 1.0 / (fan_in ** 0.5)
    b1 = jax.random.uniform(kb1, (C,), jnp.float32, -bound, bound)
    b2 = jax.random.uniform(kb2, (C,), jnp.float32, -bound, bound)

    for mode, last_relu in (('none', False), ('instance', True)):
        out = residual_block_2d(x, w1, b1, w2, b2, norm_mode=mode,
                                use_last_relu=last_relu)
        out = jax.block_until_ready(out)
        ref = _reference(x, w1, b1, w2, b2, norm_mode=mode, use_last_relu=last_relu)
        assert out.shape == (N, C, H, W)
        err = jnp.max(jnp.abs(out - ref))
        assert jnp.allclose(out, ref, atol=1e-4, rtol=1e-4), \
            f"norm_mode={mode}: max abs err = {err}"

    print("KERNEL_OK")
</pallas_src>

<mosaic_0001>
module attributes {stable_mosaic.version = 11 : i64} {
  func.func @kern(%arg0: memref<8x128xf32, #tpu.memory_space<vmem>>, %arg1: memref<8x128xf32, #tpu.memory_space<vmem>>) attributes {dimension_semantics = [], scalar_prefetch = 0 : i64, scratch_operands = 0 : i64, tpu.core_type = #tpu.core_type<tc>} {
    %c0 = arith.constant 0 : index
    %c0_0 = arith.constant 0 : index
    %0 = vector.load %arg0[%c0, %c0_0] : memref<8x128xf32, #tpu.memory_space<vmem>>, vector<8x128xf32>
    %c1_i32 = arith.constant 1 : i32
    %1 = tpu.dynamic_rotate %0 by %c1_i32 dim 1 : vector<8x128xf32>, i32 -> vector<8x128xf32>
    %c0_1 = arith.constant 0 : index
    %c0_2 = arith.constant 0 : index
    %2 = vector.load %arg1[%c0_1, %c0_2] : memref<8x128xf32, #tpu.memory_space<vmem>>, vector<8x128xf32>
    tpu.vector_store %arg1[%c0_1, %c0_2], %1 {strides = array<i32>} : memref<8x128xf32, #tpu.memory_space<vmem>>, vector<8x128xf32>,
    return
  }
}

</mosaic_0001>

<llo_original>
// kernel: tpu_custom_call.1
$region0: #{tpu_custom_call.1}
  #allocation0 [shape = 'u32[]', space=smem, size = 0x4, offset = 0x4, fixed_abs, tag = 'smem constant byte address 0x4 - core index']
  #allocation1 [shape = 'u32[144,128]{1,0:T(1,128)}', space=vmem, size = 0x12000, scoped, tag = 'internal scratch']
  %s0 = inlined_call_operand.hbm [shape: f32[8,128], index: 0, kind: input, shape index: {}]
  %s1 = inlined_call_operand.hbm [shape: f32[8,128], index: 1, kind: output, shape index: {}]
  %s2 = sld [smem:[#allocation0]]
  $region18: #{tpu_custom_call.1} parent=0
    _
  %s4 = ssub.s32 1, %s2
  %s5 = scalar_select 0, %s4, %s2
  $region1: #{tpu_custom_call.1} parent=0
    #allocation2 [shape = 'u8[4096]{0}', space=vmem, size = 0x1000, scoped, tag = 'input window, operand 0, single buffered']
    #allocation3 [shape = 's32[1]{0}', space=sflag, size = 0x4, scoped, tag = 'scoped memory for tpu_custom_call.1']
    #allocation4 [shape = 's32[1]{0}', space=sflag, size = 0x4, scoped, tag = 'scoped memory for tpu_custom_call.1']
    #allocation5 [shape = 'u8[4096]{0}', space=vmem, size = 0x1000, scoped, tag = 'output window, operand 0, single buffered']
    %6 = vsyncpa [#allocation3], 0
    %7 = vsyncpa [#allocation4], 0
    // Predicated region
    $region2: #{tpu_custom_call.1} parent=1 // pred_check
      _
    $region3: #{tpu_custom_call.1} parent=1 // pred_check_branch
      %9 = sbr.rel (0) target = $region5
    $region4: #{tpu_custom_call.1} parent=1 // pred_region
      %s11 = ssub.s32 128, 128
      %12 = vsyncadd [#allocation3], %s11
      %s14 = sshll.u32 [#allocation2], 4
      %s15 = int_to_ptr.vmem [resolvable:$true] %s14
      %17 = dma.hbm_to_vmem [thread:$0]  %s0, 128, %s15, [#allocation3]
    $region5: #{tpu_custom_call.1} parent=1 // pred_fallthru
      _
    // Predicated region
    $region6: #{tpu_custom_call.1} parent=1 // pred_check
      _
    $region7: #{tpu_custom_call.1} parent=1 // pred_check_branch
      %19 = sbr.rel (0) target = $region9
    $region8: #{tpu_custom_call.1} parent=1 // pred_region
      %20 = dma.done [#allocation3], 128
    $region9: #{tpu_custom_call.1} parent=1 // pred_fallthru
      _
    %v21 = vld [vmem:[#allocation2] sm:$0xff]
    %22 = vrot.lane.b32.xlu0 %v21, 1
    %v23 = vpop.permute.xlu0 %22
    %24 = vst [vmem:[#allocation5] sm:$0xff] %v23
    // Predicated region
    $region10: #{tpu_custom_call.1} parent=1 // pred_check
      _
    $region11: #{tpu_custom_call.1} parent=1 // pred_check_branch
      %26 = sbr.rel (0) target = $region13
    $region12: #{tpu_custom_call.1} parent=1 // pred_region
      %s28 = ssub.s32 128, 128
      %29 = vsyncadd [#allocation4], %s28
      %s31 = sshll.u32 [#allocation5], 4
      %s32 = int_to_ptr.vmem [resolvable:$true] %s31
      %34 = dma.vmem_to_hbm [thread:$0]  %s32, 128, %s1, [#allocation4]
    $region13: #{tpu_custom_call.1} parent=1 // pred_fallthru
      _
    // Predicated region
    $region14: #{tpu_custom_call.1} parent=1 // pred_check
      _
    $region15: #{tpu_custom_call.1} parent=1 // pred_check_branch
      %36 = sbr.rel (0) target = $region17
    $region16: #{tpu_custom_call.1} parent=1 // pred_region
      %37 = dma.done [#allocation4], 128
    $region17: #{tpu_custom_call.1} parent=1 // pred_fallthru
      _
    %38 = vsyncpa [#allocation3], 1
    %39 = vsyncpa [#allocation4], 1

</llo_original>
